<compile_context>
chip_gen: v5e
topology: v5e:2x2
jax: 0.10.0
libtpu: 0.0.40
codegen_flags: <defaults>
</compile_context>

<pallas_src>
import jax
import jax.numpy as jnp
from jax.experimental import pallas as pl
from jax.experimental.pallas import tpu as pltpu


def _round_up(x, m):
    return ((x + m - 1) // m) * m


def aggregate_kernel(va_ref, vb_ref,
                     w1a_ref, w1b_ref, b1_ref,
                     w2_ref, b2_ref,
                     w3_ref, b3_ref,
                     out_ref):
    # First MLP layer. The sequence-sum is folded into these matmuls:
    #   sum_s V[:, s, :] @ W1h  ==  reshape(V, (B, S*F)) @ tile(W1h, (S, 1))
    # and the concat is folded by splitting W1 into its V_A / V_B halves.
    h1 = (jnp.dot(va_ref[...], w1a_ref[...], preferred_element_type=jnp.float32)
          + jnp.dot(vb_ref[...], w1b_ref[...], preferred_element_type=jnp.float32)
          + b1_ref[...])
    h1 = jnp.maximum(h1, 0.0)                                    # ReLU

    # Second MLP layer (f32 x f32 on the MXU, f32 accumulation).
    h2 = jnp.dot(h1, w2_ref[...], preferred_element_type=jnp.float32) + b2_ref[...]
    h2 = jnp.maximum(h2, 0.0)                                    # ReLU

    # Output head (lane dim padded to a multiple of 128 -> unmasked vst).
    y = jnp.dot(h2, w3_ref[...], preferred_element_type=jnp.float32) + b3_ref[...]
    out_ref[...] = y.astype(out_ref.dtype)

    # TODO(synk): nn.Dropout(0.2) is identity in eval mode; train-mode stochastic
    # masking is intentionally not reproduced here.


def aggregate_forward(V_A, V_B, params, *, tile_b=None, stream_dtype=jnp.bfloat16):
    """params: dict with W1 (2F,H), b1 (H,), W2 (H,H), b2 (H,), W3 (H,O), b3 (O,).

    Weights are stored pre-transposed as (in, out), i.e. torch weight .T.
    `stream_dtype` is the dtype used for the two large streamed inputs (and the
    first-layer weights); accumulation is always f32.
    """
    B, S, F = V_A.shape
    H = params["W1"].shape[1]
    O = params["W3"].shape[1]
    SF = S * F

    # ---- padded dims: lane-dense hidden / output ----
    H_pad = _round_up(H, 128)
    O_pad = _round_up(O, 128)

    # ---- batch tile sizing (VMEM-aware; conservative for v7x's 64 MiB VMEM) ----
    stream_itemsize = jnp.dtype(stream_dtype).itemsize
    bytes_per_row = SF * stream_itemsize
    B8 = _round_up(B, 8)
    if tile_b is None:
        # ~4 MiB per input tile => 2 inputs x 2 pipeline buffers ~= 16 MiB in flight
        # (fits v7x's 64 MiB per-TC VMEM with headroom; amortizes per-step overhead
        # on v5e/v6e). Row cap keeps f32 intermediates modest.
        tile_b = (4 * 1024 * 1024) // max(bytes_per_row, 1)
        tile_b = max(8, min(4096, (tile_b // 8) * 8))
    tile_b = max(8, min((tile_b // 8) * 8, B8))
    # Guarantee >= 2 grid steps when the batch allows: needed for DMA/compute
    # overlap everywhere and for v7x's two TensorCores to both get work.
    if B8 // tile_b < 2 and B8 >= 16:
        tile_b = max(8, ((B8 // 2) // 8) * 8)
    B_pad = _round_up(B, tile_b)

    # ---- lane-dense streamed inputs: (B, S, F) -> (B, S*F), bf16 by default ----
    V_A2 = V_A.reshape(B, SF).astype(stream_dtype)
    V_B2 = V_B.reshape(B, SF).astype(stream_dtype)
    if B_pad != B:
        pad = ((0, B_pad - B), (0, 0))
        V_A2 = jnp.pad(V_A2, pad)
        V_B2 = jnp.pad(V_B2, pad)

    # ---- weight prep: split W1 into halves, fold the sequence-sum via tiling,
    #      zero-pad H/O to multiples of 128 ----
    W1 = params["W1"].astype(jnp.float32)
    W1a_rep = jnp.tile(W1[:F, :], (S, 1))                       # (S*F, H)
    W1b_rep = jnp.tile(W1[F:, :], (S, 1))                       # (S*F, H)
    W1a_rep = jnp.pad(W1a_rep, ((0, 0), (0, H_pad - H))).astype(stream_dtype)
    W1b_rep = jnp.pad(W1b_rep, ((0, 0), (0, H_pad - H))).astype(stream_dtype)
    b1p = jnp.pad(params["b1"].astype(jnp.float32), ((0, H_pad - H),)).reshape(1, H_pad)
    W2p = jnp.pad(params["W2"].astype(jnp.float32),
                  ((0, H_pad - H), (0, H_pad - H)))
    b2p = jnp.pad(params["b2"].astype(jnp.float32), ((0, H_pad - H),)).reshape(1, H_pad)
    W3p = jnp.pad(params["W3"].astype(jnp.float32),
                  ((0, H_pad - H), (0, O_pad - O)))
    b3p = jnp.pad(params["b3"].astype(jnp.float32), ((0, O_pad - O),)).reshape(1, O_pad)

    grid = (pl.cdiv(B_pad, tile_b),)

    # Resident (constant-index) specs for the small weights/biases.
    def const2d(shape):
        return pl.BlockSpec(shape, lambda i: (0, 0))

    flops = 2 * B_pad * (2 * SF * H_pad + H_pad * H_pad + H_pad * O_pad)
    bytes_accessed = (2 * B_pad * SF * stream_itemsize
                      + B_pad * O_pad * 4
                      + 2 * SF * H_pad * stream_itemsize
                      + (H_pad * H_pad + H_pad * O_pad + 2 * H_pad + O_pad) * 4)

    y_full = pl.pallas_call(
        aggregate_kernel,
        out_shape=jax.ShapeDtypeStruct((B_pad, O_pad), jnp.float32),
        grid=grid,
        in_specs=[
            pl.BlockSpec((tile_b, SF), lambda i: (i, 0)),        # V_A tile (lane-dense)
            pl.BlockSpec((tile_b, SF), lambda i: (i, 0)),        # V_B tile (lane-dense)
            const2d((SF, H_pad)),                                # W1a (seq-tiled)
            const2d((SF, H_pad)),                                # W1b (seq-tiled)
            const2d((1, H_pad)),                                 # b1
            const2d((H_pad, H_pad)),                             # W2
            const2d((1, H_pad)),                                 # b2
            const2d((H_pad, O_pad)),                             # W3 (padded)
            const2d((1, O_pad)),                                 # b3 (padded)
        ],
        out_specs=pl.BlockSpec((tile_b, O_pad), lambda i: (i, 0)),
        compiler_params=pltpu.CompilerParams(
            dimension_semantics=("parallel",),
            # Explicit scoped-VMEM budget: covers 2 inputs x 2 buffers x ~4 MiB
            # + output double-buffer + weights; fits v7x's 64 MiB physical VMEM
            # and lifts v5e's 16 MiB / v6e's 32 MiB scoped defaults.
            vmem_limit_bytes=48 * 1024 * 1024),
        cost_estimate=pl.CostEstimate(
            flops=flops, transcendentals=0, bytes_accessed=bytes_accessed),
    )(V_A2, V_B2, W1a_rep, W1b_rep, b1p, W2p, b2p, W3p, b3p)

    return y_full[:B, :O]


def aggregate_reference(V_A, V_B, params):
    """Plain-JAX reference mirroring the PyTorch forward (eval mode), in f32."""
    sA = jnp.sum(V_A, axis=1)
    sB = jnp.sum(V_B, axis=1)
    x = jnp.concatenate([sA, sB], axis=1)
    h1 = jnp.maximum(x @ params["W1"] + params["b1"], 0.0)
    h2 = jnp.maximum(h1 @ params["W2"] + params["b2"], 0.0)
    return h2 @ params["W3"] + params["b3"]


if __name__ == "__main__":
    # Small, module-consistent shapes.
    B, S, F = 2, 8, 32          # batch, seq, per-sequence feature dim
    num_inputs = 2 * F          # 64  (concat of the two summed streams)
    num_hiddens = 32
    num_outputs = 4

    key = jax.random.PRNGKey(0)
    kva, kvb, k1, k2, k3, k4, k5, k6 = jax.random.split(key, 8)

    V_A = jax.random.normal(kva, (B, S, F), dtype=jnp.float32)
    V_B = jax.random.normal(kvb, (B, S, F), dtype=jnp.float32)

    # Deterministic parameter init (weights stored as (in, out) = torch W.T).
    params = {
        "W1": jax.random.normal(k1, (num_inputs, num_hiddens), jnp.float32) * 0.1,
        "b1": jax.random.normal(k2, (num_hiddens,), jnp.float32) * 0.1,
        "W2": jax.random.normal(k3, (num_hiddens, num_hiddens), jnp.float32) * 0.1,
        "b2": jax.random.normal(k4, (num_hiddens,), jnp.float32) * 0.1,
        "W3": jax.random.normal(k5, (num_hiddens, num_outputs), jnp.float32) * 0.1,
        "b3": jax.random.normal(k6, (num_outputs,), jnp.float32) * 0.1,
    }

    y_ref = aggregate_reference(V_A, V_B, params)

    # 1) f32-streaming path: exact-math check vs reference.
    y32 = jax.block_until_ready(
        aggregate_forward(V_A, V_B, params, stream_dtype=jnp.float32))
    assert y32.shape == (B, num_outputs)
    assert jnp.allclose(y32, y_ref, atol=1e-4, rtol=1e-4), "f32 path mismatch"

    # 2) Default bf16-streaming path (half the HBM traffic); precision-tolerant check.
    ybf = jax.block_until_ready(aggregate_forward(V_A, V_B, params))
    assert ybf.shape == (B, num_outputs)
    assert jnp.allclose(ybf, y_ref, atol=5e-2, rtol=5e-2), "bf16 path mismatch"

    print("KERNEL_OK")
</pallas_src>

<mosaic_0001>
module attributes {stable_mosaic.version = 11 : i64} {
  func.func @aggregate_kernel(%arg0: i32, %arg1: memref<8x256xf32, #tpu.memory_space<vmem>>, %arg2: memref<8x256xf32, #tpu.memory_space<vmem>>, %arg3: memref<256x128xf32, #tpu.memory_space<vmem>>, %arg4: memref<256x128xf32, #tpu.memory_space<vmem>>, %arg5: memref<1x128xf32, #tpu.memory_space<vmem>>, %arg6: memref<128x128xf32, #tpu.memory_space<vmem>>, %arg7: memref<1x128xf32, #tpu.memory_space<vmem>>, %arg8: memref<128x128xf32, #tpu.memory_space<vmem>>, %arg9: memref<1x128xf32, #tpu.memory_space<vmem>>, %arg10: memref<8x128xf32, #tpu.memory_space<vmem>>) attributes {dimension_semantics = [#tpu.dimension_semantics<parallel>], iteration_bounds = array<i64: 1>, scalar_prefetch = 0 : i64, scratch_operands = 0 : i64, tpu.core_type = #tpu.core_type<tc>, window_params = [{transform_indices = @transform_0, window_bounds = array<i64: 8, 256>}, {transform_indices = @transform_1, window_bounds = array<i64: 8, 256>}, {pipeline_mode = #tpu.pipeline_mode<synchronous>, transform_indices = @transform_2, window_bounds = array<i64: 256, 128>}, {pipeline_mode = #tpu.pipeline_mode<synchronous>, transform_indices = @transform_3, window_bounds = array<i64: 256, 128>}, {pipeline_mode = #tpu.pipeline_mode<synchronous>, transform_indices = @transform_4, window_bounds = array<i64: 1, 128>}, {pipeline_mode = #tpu.pipeline_mode<synchronous>, transform_indices = @transform_5, window_bounds = array<i64: 128, 128>}, {pipeline_mode = #tpu.pipeline_mode<synchronous>, transform_indices = @transform_6, window_bounds = array<i64: 1, 128>}, {pipeline_mode = #tpu.pipeline_mode<synchronous>, transform_indices = @transform_7, window_bounds = array<i64: 128, 128>}, {pipeline_mode = #tpu.pipeline_mode<synchronous>, transform_indices = @transform_8, window_bounds = array<i64: 1, 128>}, {transform_indices = @transform_9, window_bounds = array<i64: 8, 128>}]} {
    %c0 = arith.constant 0 : index
    %c0_0 = arith.constant 0 : index
    %0 = vector.load %arg1[%c0, %c0_0] : memref<8x256xf32, #tpu.memory_space<vmem>>, vector<8x256xf32>
    %c0_1 = arith.constant 0 : index
    %c0_2 = arith.constant 0 : index
    %1 = vector.load %arg3[%c0_1, %c0_2] : memref<256x128xf32, #tpu.memory_space<vmem>>, vector<256x128xf32>
    %cst = arith.constant dense<0.000000e+00> : vector<8x128xf32>
    %2 = tpu.matmul %0, %1, %cst {dimension_numbers = #tpu.dot_dimension_numbers<[1], [0], [0], [1], [0, 0, 1, 1], [], []>} : vector<8x256xf32>, vector<256x128xf32>, vector<8x128xf32> -> vector<8x128xf32>
    %c0_3 = arith.constant 0 : index
    %c0_4 = arith.constant 0 : index
    %3 = vector.load %arg2[%c0_3, %c0_4] : memref<8x256xf32, #tpu.memory_space<vmem>>, vector<8x256xf32>
    %c0_5 = arith.constant 0 : index
    %c0_6 = arith.constant 0 : index
    %4 = vector.load %arg4[%c0_5, %c0_6] : memref<256x128xf32, #tpu.memory_space<vmem>>, vector<256x128xf32>
    %cst_7 = arith.constant dense<0.000000e+00> : vector<8x128xf32>
    %5 = tpu.matmul %3, %4, %cst_7 {dimension_numbers = #tpu.dot_dimension_numbers<[1], [0], [0], [1], [0, 0, 1, 1], [], []>} : vector<8x256xf32>, vector<256x128xf32>, vector<8x128xf32> -> vector<8x128xf32>
    %6 = arith.addf %2, %5 : vector<8x128xf32>
    %c0_8 = arith.constant 0 : index
    %c0_9 = arith.constant 0 : index
    %7 = vector.load %arg5[%c0_8, %c0_9] : memref<1x128xf32, #tpu.memory_space<vmem>>, vector<1x128xf32>
    %8 = vector.broadcast %7 : vector<1x128xf32> to vector<8x128xf32>
    %9 = arith.addf %6, %8 : vector<8x128xf32>
    %cst_10 = arith.constant 0.000000e+00 : f32
    %10 = vector.broadcast %cst_10 : f32 to vector<8x128xf32>
    %11 = arith.maximumf %9, %10 : vector<8x128xf32>
    %c0_11 = arith.constant 0 : index
    %c0_12 = arith.constant 0 : index
    %12 = vector.load %arg6[%c0_11, %c0_12] : memref<128x128xf32, #tpu.memory_space<vmem>>, vector<128x128xf32>
    %cst_13 = arith.constant dense<0.000000e+00> : vector<8x128xf32>
    %13 = tpu.matmul %11, %12, %cst_13 {dimension_numbers = #tpu.dot_dimension_numbers<[1], [0], [0], [1], [0, 0, 1, 1], [], []>} : vector<8x128xf32>, vector<128x128xf32>, vector<8x128xf32> -> vector<8x128xf32>
    %c0_14 = arith.constant 0 : index
    %c0_15 = arith.constant 0 : index
    %14 = vector.load %arg7[%c0_14, %c0_15] : memref<1x128xf32, #tpu.memory_space<vmem>>, vector<1x128xf32>
    %15 = vector.broadcast %14 : vector<1x128xf32> to vector<8x128xf32>
    %16 = arith.addf %13, %15 : vector<8x128xf32>
    %cst_16 = arith.constant 0.000000e+00 : f32
    %17 = vector.broadcast %cst_16 : f32 to vector<8x128xf32>
    %18 = arith.maximumf %16, %17 : vector<8x128xf32>
    %c0_17 = arith.constant 0 : index
    %c0_18 = arith.constant 0 : index
    %19 = vector.load %arg8[%c0_17, %c0_18] : memref<128x128xf32, #tpu.memory_space<vmem>>, vector<128x128xf32>
    %cst_19 = arith.constant dense<0.000000e+00> : vector<8x128xf32>
    %20 = tpu.matmul %18, %19, %cst_19 {dimension_numbers = #tpu.dot_dimension_numbers<[1], [0], [0], [1], [0, 0, 1, 1], [], []>} : vector<8x128xf32>, vector<128x128xf32>, vector<8x128xf32> -> vector<8x128xf32>
    %c0_20 = arith.constant 0 : index
    %c0_21 = arith.constant 0 : index
    %21 = vector.load %arg9[%c0_20, %c0_21] : memref<1x128xf32, #tpu.memory_space<vmem>>, vector<1x128xf32>
    %22 = vector.broadcast %21 : vector<1x128xf32> to vector<8x128xf32>
    %23 = arith.addf %20, %22 : vector<8x128xf32>
    %c0_22 = arith.constant 0 : index
    %c0_23 = arith.constant 0 : index
    %24 = vector.load %arg10[%c0_22, %c0_23] : memref<8x128xf32, #tpu.memory_space<vmem>>, vector<8x128xf32>
    tpu.vector_store %arg10[%c0_22, %c0_23], %23 {strides = array<i32>} : memref<8x128xf32, #tpu.memory_space<vmem>>, vector<8x128xf32>,
    return
  }
  func.func @transform_0(%arg0: i32) -> (i32, i32) {
    %c0_i32 = arith.constant 0 : i32
    %c0_i32_0 = arith.constant 0 : i32
    return %arg0, %c0_i32 : i32, i32
  }
  func.func @transform_1(%arg0: i32) -> (i32, i32) {
    %c0_i32 = arith.constant 0 : i32
    %c0_i32_0 = arith.constant 0 : i32
    return %arg0, %c0_i32 : i32, i32
  }
  func.func @transform_2(%arg0: i32) -> (i32, i32) {
    %c0_i32 = arith.constant 0 : i32
    %c0_i32_0 = arith.constant 0 : i32
    %c0_i32_1 = arith.constant 0 : i32
    return %c0_i32, %c0_i32_0 : i32, i32
  }
  func.func @transform_3(%arg0: i32) -> (i32, i32) {
    %c0_i32 = arith.constant 0 : i32
    %c0_i32_0 = arith.constant 0 : i32
    %c0_i32_1 = arith.constant 0 : i32
    return %c0_i32, %c0_i32_0 : i32, i32
  }
  func.func @transform_4(%arg0: i32) -> (i32, i32) {
    %c0_i32 = arith.constant 0 : i32
    %c0_i32_0 = arith.constant 0 : i32
    %c0_i32_1 = arith.constant 0 : i32
    return %c0_i32, %c0_i32_0 : i32, i32
  }
  func.func @transform_5(%arg0: i32) -> (i32, i32) {
    %c0_i32 = arith.constant 0 : i32
    %c0_i32_0 = arith.constant 0 : i32
    %c0_i32_1 = arith.constant 0 : i32
    return %c0_i32, %c0_i32_0 : i32, i32
  }
  func.func @transform_6(%arg0: i32) -> (i32, i32) {
    %c0_i32 = arith.constant 0 : i32
    %c0_i32_0 = arith.constant 0 : i32
    %c0_i32_1 = arith.constant 0 : i32
    return %c0_i32, %c0_i32_0 : i32, i32
  }
  func.func @transform_7(%arg0: i32) -> (i32, i32) {
    %c0_i32 = arith.constant 0 : i32
    %c0_i32_0 = arith.constant 0 : i32
    %c0_i32_1 = arith.constant 0 : i32
    return %c0_i32, %c0_i32_0 : i32, i32
  }
  func.func @transform_8(%arg0: i32) -> (i32, i32) {
    %c0_i32 = arith.constant 0 : i32
    %c0_i32_0 = arith.constant 0 : i32
    %c0_i32_1 = arith.constant 0 : i32
    return %c0_i32, %c0_i32_0 : i32, i32
  }
  func.func @transform_9(%arg0: i32) -> (i32, i32) {
    %c0_i32 = arith.constant 0 : i32
    %c0_i32_0 = arith.constant 0 : i32
    return %arg0, %c0_i32 : i32, i32
  }
}

</mosaic_0001>

<llo_original>
// kernel: tpu_custom_call.1
$region0: #{tpu_custom_call.1}
  #allocation0 [shape = 'u32[]', space=smem, size = 0x4, offset = 0x4, fixed_abs, tag = 'smem constant byte address 0x4 - core index']
  #allocation1 [shape = 'u32[72,128]{1,0:T(1,128)}', space=vmem, size = 0x9000, scoped, tag = 'internal scratch']
  %s0 = inlined_call_operand.hbm [shape: f32[8,256], index: 0, kind: input, shape index: {}]
  %s1 = inlined_call_operand.hbm [shape: f32[8,256], index: 1, kind: input, shape index: {}]
  %s2 = inlined_call_operand.hbm [shape: f32[256,128], index: 2, kind: input, shape index: {}]
  %s3 = inlined_call_operand.hbm [shape: f32[256,128], index: 3, kind: input, shape index: {}]
  %s4 = inlined_call_operand.vmem [shape: f32[1,128], index: 4, kind: input, shape index: {}]
  %s5 = inlined_call_operand.hbm [shape: f32[128,128], index: 5, kind: input, shape index: {}]
  %s6 = inlined_call_operand.vmem [shape: f32[1,128], index: 6, kind: input, shape index: {}]
  %s7 = inlined_call_operand.hbm [shape: f32[128,128], index: 7, kind: input, shape index: {}]
  %s8 = inlined_call_operand.vmem [shape: f32[1,128], index: 8, kind: input, shape index: {}]
  %s9 = inlined_call_operand.hbm [shape: f32[8,128], index: 9, kind: output, shape index: {}]
  %s10 = sld [smem:[#allocation0]]
  $region70: #{tpu_custom_call.1} parent=0
    _
  %s12 = ssub.s32 1, %s10
  %s13 = scalar_select 0, %s12, %s10
  $region1: #{tpu_custom_call.1} parent=0
    #allocation2 [shape = 'u8[8192]{0}', space=vmem, size = 0x2000, scoped, tag = 'input window, operand 0, single buffered']
    #allocation3 [shape = 's32[1]{0}', space=sflag, size = 0x4, scoped, tag = 'scoped memory for tpu_custom_call.1']
    #allocation4 [shape = 's32[1]{0}', space=sflag, size = 0x4, scoped, tag = 'scoped memory for tpu_custom_call.1']
    #allocation5 [shape = 'u8[8192]{0}', space=vmem, size = 0x2000, scoped, tag = 'input window, operand 1, single buffered']
    #allocation6 [shape = 's32[1]{0}', space=sflag, size = 0x4, scoped, tag = 'scoped memory for tpu_custom_call.1']
    #allocation7 [shape = 'u8[131072]{0}', space=vmem, size = 0x20000, scoped, tag = 'input window, operand 2, single buffered']
    #allocation8 [shape = 'u8[131072]{0}', space=vmem, size = 0x20000, scoped, tag = 'input window, operand 3, single buffered']
    #allocation9 [shape = 's32[1]{0}', space=sflag, size = 0x4, scoped, tag = 'scoped memory for tpu_custom_call.1']
    #allocation10 [shape = 'u8[65536]{0}', space=vmem, size = 0x10000, scoped, tag = 'input window, operand 5, single buffered']
    #allocation11 [shape = 'u8[65536]{0}', space=vmem, size = 0x10000, scoped, tag = 'input window, operand 7, single buffered']
    #allocation12 [shape = 's32[1]{0}', space=sflag, size = 0x4, scoped, tag = 'scoped memory for tpu_custom_call.1']
    #allocation13 [shape = 'u8[4096]{0}', space=vmem, size = 0x1000, scoped, tag = 'output window, operand 0, single buffered']
    %14 = vsyncpa [#allocation3], 0
    %15 = vsyncpa [#allocation6], 0
    %16 = vsyncpa [#allocation9], 0
    %17 = vsyncpa [#allocation12], 0
    %18 = vsyncpa [#allocation4], 0
    // Predicated region
    $region2: #{tpu_custom_call.1} parent=1 // pred_check
      _
    $region3: #{tpu_custom_call.1} parent=1 // pred_check_branch
      %20 = sbr.rel (0) target = $region5
    $region4: #{tpu_custom_call.1} parent=1 // pred_region
      %22 = vsyncadd [#allocation3], 0
      %s24 = sshll.u32 %s0, 4
      %s25 = int_to_ptr.hbm [resolvable:$true] %s24
      %s26 = sshll.u32 [#allocation2], 4
      %s27 = int_to_ptr.vmem [resolvable:$true] %s26
      %29 = dma.hbm_to_vmem [thread:$0]  %s25, 256, %s27, [#allocation3]
    $region5: #{tpu_custom_call.1} parent=1 // pred_fallthru
      _
    // Predicated region
    $region6: #{tpu_custom_call.1} parent=1 // pred_check
      _
    $region7: #{tpu_custom_call.1} parent=1 // pred_check_branch
      %31 = sbr.rel (0) target = $region9
    $region8: #{tpu_custom_call.1} parent=1 // pred_region
      %33 = vsyncadd [#allocation6], 0
      %s35 = sshll.u32 %s1, 4
      %s36 = int_to_ptr.hbm [resolvable:$true] %s35
      %s37 = sshll.u32 [#allocation5], 4
      %s38 = int_to_ptr.vmem [resolvable:$true] %s37
      %40 = dma.hbm_to_vmem [thread:$0]  %s36, 256, %s38, [#allocation6]
    $region9: #{tpu_custom_call.1} parent=1 // pred_fallthru
      _
    // Predicated region
    $region10: #{tpu_custom_call.1} parent=1 // pred_check
      _
    $region11: #{tpu_custom_call.1} parent=1 // pred_check_branch
      %42 = sbr.rel (0) target = $region13
    $region12: #{tpu_custom_call.1} parent=1 // pred_region
      %44 = vsyncadd [#allocation6], 0
      %s45 = sshll.u32 %s2, 4
      %s46 = int_to_ptr.hbm [resolvable:$true] %s45
      %s47 = sshll.u32 [#allocation7], 4
      %s48 = int_to_ptr.vmem [resolvable:$true] %s47
      %53 = dma.hbm_to_vmem [thread:$0]  %s46, 4096, %s48, [#allocation6], 128, 128, 8
    $region13: #{tpu_custom_call.1} parent=1 // pred_fallthru
      _
    // Predicated region
    $region14: #{tpu_custom_call.1} parent=1 // pred_check
      _
    $region15: #{tpu_custom_call.1} parent=1 // pred_check_branch
      %55 = sbr.rel (0) target = $region17
    $region16: #{tpu_custom_call.1} parent=1 // pred_region
      %57 = vsyncadd [#allocation9], 0
      %s58 = sshll.u32 %s3, 4
      %s59 = int_to_ptr.hbm [resolvable:$true] %s58
      %s60 = sshll.u32 [#allocation8], 4
      %s61 = int_to_ptr.vmem [resolvable:$true] %s60
      %66 = dma.hbm_to_vmem [thread:$0]  %s59, 4096, %s61, [#allocation9], 128, 128, 8
    $region17: #{tpu_custom_call.1} parent=1 // pred_fallthru
      _
    // Predicated region
    $region18: #{tpu_custom_call.1} parent=1 // pred_check
      _
    $region19: #{tpu_custom_call.1} parent=1 // pred_check_branch
      %68 = sbr.rel (0) target = $region21
    $region20: #{tpu_custom_call.1} parent=1 // pred_region
      _
    $region21: #{tpu_custom_call.1} parent=1 // pred_fallthru
      _
    // Predicated region
    $region22: #{tpu_custom_call.1} parent=1 // pred_check
      _
    $region23: #{tpu_custom_call.1} parent=1 // pred_check_branch
      %70 = sbr.rel (0) target = $region25
    $region24: #{tpu_custom_call.1} parent=1 // pred_region
      %72 = vsyncadd [#allocation9], 0
      %s73 = sshll.u32 %s5, 4
      %s74 = int_to_ptr.hbm [resolvable:$true] %s73
      %s75 = sshll.u32 [#allocation10], 4
      %s76 = int_to_ptr.vmem [resolvable:$true] %s75
      %81 = dma.hbm_to_vmem [thread:$0]  %s74, 2048, %s76, [#allocation9], 128, 128, 8
    $region25: #{tpu_custom_call.1} parent=1 // pred_fallthru
      _
    // Predicated region
    $region26: #{tpu_custom_call.1} parent=1 // pred_check
      _
    $region27: #{tpu_custom_call.1} parent=1 // pred_check_branch
      %83 = sbr.rel (0) target = $region29
    $region28: #{tpu_custom_call.1} parent=1 // pred_region
      _
    $region29: #{tpu_custom_call.1} parent=1 // pred_fallthru
      _
    // Predicated region
    $region30: #{tpu_custom_call.1} parent=1 // pred_check
      _
    $region31: #{tpu_custom_call.1} parent=1 // pred_check_branch
      %85 = sbr.rel (0) target = $region33
    $region32: #{tpu_custom_call.1} parent=1 // pred_region
      %87 = vsyncadd [#allocation12], 0
      %s88 = sshll.u32 %s7, 4
      %s89 = int_to_ptr.hbm [resolvable:$true] %s88
      %s90 = sshll.u32 [#allocation11], 4
      %s91 = int_to_ptr.vmem [resolvable:$true] %s90
      %96 = dma.hbm_to_vmem [thread:$0]  %s89, 2048, %s91, [#allocation12], 128, 128, 8
    $region33: #{tpu_custom_call.1} parent=1 // pred_fallthru
      _
    // Predicated region
    $region34: #{tpu_custom_call.1} parent=1 // pred_check
      _
    $region35: #{tpu_custom_call.1} parent=1 // pred_check_branch
      %98 = sbr.rel (0) target = $region37
    $region36: #{tpu_custom_call.1} parent=1 // pred_region
      _
    $region37: #{tpu_custom_call.1} parent=1 // pred_fallthru
      _
    // Predicated region
    $region38: #{tpu_custom_call.1} parent=1 // pred_check
      _
    $region39: #{tpu_custom_call.1} parent=1 // pred_check_branch
      %100 = sbr.rel (0) target = $region41
    $region40: #{tpu_custom_call.1} parent=1 // pred_region
      %102 = dma.done [#allocation3], 256
    $region41: #{tpu_custom_call.1} parent=1 // pred_fallthru
      _
    // Predicated region
    $region42: #{tpu_custom_call.1} parent=1 // pred_check
      _
    $region43: #{tpu_custom_call.1} parent=1 // pred_check_branch
      %104 = sbr.rel (0) target = $region45
    $region44: #{tpu_custom_call.1} parent=1 // pred_region
      %106 = dma.done [#allocation6], 256
    $region45: #{tpu_custom_call.1} parent=1 // pred_fallthru
      _
    // Predicated region
    $region46: #{tpu_custom_call.1} parent=1 // pred_check
      _
    $region47: #{tpu_custom_call.1} parent=1 // pred_check_branch
      %108 = sbr.rel (0) target = $region49
    $region48: #{tpu_custom_call.1} parent=1 // pred_region
      %110 = dma.done [#allocation6], 4096
    $region49: #{tpu_custom_call.1} parent=1 // pred_fallthru
      _
    // Predicated region
    $region50: #{tpu_custom_call.1} parent=1 // pred_check
      _
    $region51: #{tpu_custom_call.1} parent=1 // pred_check_branch
      %112 = sbr.rel (0) target = $region53
    $region52: #{tpu_custom_call.1} parent=1 // pred_region
      %114 = dma.done [#allocation9], 4096
    $region53: #{tpu_custom_call.1} parent=1 // pred_fallthru
      _
    // Predicated region
    $region54: #{tpu_custom_call.1} parent=1 // pred_check
      _
    $region55: #{tpu_custom_call.1} parent=1 // pred_check_branch
      %116 = sbr.rel (0) target = $region57
    $region56: #{tpu_custom_call.1} parent=1 // pred_region
      %118 = dma.done [#allocation9], 2048
    $region57: #{tpu_custom_call.1} parent=1 // pred_fallthru
      _
    // Predicated region
    $region58: #{tpu_custom_call.1} parent=1 // pred_check
      _
    $region59: #{tpu_custom_call.1} parent=1 // pred_check_branch
      %120 = sbr.rel (0) target = $region61
    $region60: #{tpu_custom_call.1} parent=1 // pred_region
      %122 = dma.done [#allocation12], 2048
    $region61: #{tpu_custom_call.1} parent=1 // pred_fallthru
      _
    %v123 = vld [vmem:[#allocation2] sm:$0xff]
    %v124 = vld [vmem:[#allocation2 + $0x8] sm:$0xff]
    %v125 = vld [vmem:[#allocation7] sm:$0xff]
    %v126 = vld [vmem:[#allocation7 + $0x8] sm:$0xff]
    %v127 = vld [vmem:[#allocation7 + $0x10] sm:$0xff]
    %v128 = vld [vmem:[#allocation7 + $0x18] sm:$0xff]
    %v129 = vld [vmem:[#allocation7 + $0x20] sm:$0xff]
    %v130 = vld [vmem:[#allocation7 + $0x28] sm:$0xff]
    %v131 = vld [vmem:[#allocation7 + $0x30] sm:$0xff]
    %v132 = vld [vmem:[#allocation7 + $0x38] sm:$0xff]
    %v133 = vld [vmem:[#allocation7 + $0x40] sm:$0xff]
    %v134 = vld [vmem:[#allocation7 + $0x48] sm:$0xff]
    %v135 = vld [vmem:[#allocation7 + $0x50] sm:$0xff]
    %v136 = vld [vmem:[#allocation7 + $0x58] sm:$0xff]
    %v137 = vld [vmem:[#allocation7 + $0x60] sm:$0xff]
    %v138 = vld [vmem:[#allocation7 + $0x68] sm:$0xff]
    %v139 = vld [vmem:[#allocation7 + $0x70] sm:$0xff]
    %v140 = vld [vmem:[#allocation7 + $0x78] sm:$0xff]
    %v141 = vld [vmem:[#allocation7 + $0x80] sm:$0xff]
    %v142 = vld [vmem:[#allocation7 + $0x88] sm:$0xff]
    %v143 = vld [vmem:[#allocation7 + $0x90] sm:$0xff]
    %v144 = vld [vmem:[#allocation7 + $0x98] sm:$0xff]
    %v145 = vld [vmem:[#allocation7 + $0xa0] sm:$0xff]
    %v146 = vld [vmem:[#allocation7 + $0xa8] sm:$0xff]
    %v147 = vld [vmem:[#allocation7 + $0xb0] sm:$0xff]
    %v148 = vld [vmem:[#allocation7 + $0xb8] sm:$0xff]
    %v149 = vld [vmem:[#allocation7 + $0xc0] sm:$0xff]
    %v150 = vld [vmem:[#allocation7 + $0xc8] sm:$0xff]
    %v151 = vld [vmem:[#allocation7 + $0xd0] sm:$0xff]
    %v152 = vld [vmem:[#allocation7 + $0xd8] sm:$0xff]
    %v153 = vld [vmem:[#allocation7 + $0xe0] sm:$0xff]
    %v154 = vld [vmem:[#allocation7 + $0xe8] sm:$0xff]
    %v155 = vld [vmem:[#allocation7 + $0xf0] sm:$0xff]
    %v156 = vld [vmem:[#allocation7 + $0xf8] sm:$0xff]
    %v157 = vld [vmem:[#allocation5] sm:$0xff]
    %v158 = vld [vmem:[#allocation5 + $0x8] sm:$0xff]
    %v159 = vld [vmem:[#allocation8] sm:$0xff]
    %v160 = vld [vmem:[#allocation8 + $0x8] sm:$0xff]
    %v161 = vld [vmem:[#allocation8 + $0x10] sm:$0xff]
    %v162 = vld [vmem:[#allocation8 + $0x18] sm:$0xff]
    %v163 = vld [vmem:[#allocation8 + $0x20] sm:$0xff]
    %v164 = vld [vmem:[#allocation8 + $0x28] sm:$0xff]
    %v165 = vld [vmem:[#allocation8 + $0x30] sm:$0xff]
    %v166 = vld [vmem:[#allocation8 + $0x38] sm:$0xff]
    %v167 = vld [vmem:[#allocation8 + $0x40] sm:$0xff]
    %v168 = vld [vmem:[#allocation8 + $0x48] sm:$0xff]
    %v169 = vld [vmem:[#allocation8 + $0x50] sm:$0xff]
    %v170 = vld [vmem:[#allocation8 + $0x58] sm:$0xff]
    %v171 = vld [vmem:[#allocation8 + $0x60] sm:$0xff]
    %v172 = vld [vmem:[#allocation8 + $0x68] sm:$0xff]
    %v173 = vld [vmem:[#allocation8 + $0x70] sm:$0xff]
    %v174 = vld [vmem:[#allocation8 + $0x78] sm:$0xff]
    %v175 = vld [vmem:[#allocation8 + $0x80] sm:$0xff]
    %v176 = vld [vmem:[#allocation8 + $0x88] sm:$0xff]
    %v177 = vld [vmem:[#allocation8 + $0x90] sm:$0xff]
    %v178 = vld [vmem:[#allocation8 + $0x98] sm:$0xff]
    %v179 = vld [vmem:[#allocation8 + $0xa0] sm:$0xff]
    %v180 = vld [vmem:[#allocation8 + $0xa8] sm:$0xff]
    %v181 = vld [vmem:[#allocation8 + $0xb0] sm:$0xff]
    %v182 = vld [vmem:[#allocation8 + $0xb8] sm:$0xff]
    %v183 = vld [vmem:[#allocation8 + $0xc0] sm:$0xff]
    %v184 = vld [vmem:[#allocation8 + $0xc8] sm:$0xff]
    %v185 = vld [vmem:[#allocation8 + $0xd0] sm:$0xff]
    %v186 = vld [vmem:[#allocation8 + $0xd8] sm:$0xff]
    %v187 = vld [vmem:[#allocation8 + $0xe0] sm:$0xff]
    %v188 = vld [vmem:[#allocation8 + $0xe8] sm:$0xff]
    %v189 = vld [vmem:[#allocation8 + $0xf0] sm:$0xff]
    %v190 = vld [vmem:[#allocation8 + $0xf8] sm:$0xff]
    %191 = vmatpush.msra.mxu0 %v174
    %192 = vmatpush.msra.mxu0 %v173
    %193 = vmatpush.msra.mxu0 %v172
    %194 = vmatpush.msra.mxu0 %v171
    %195 = vmatpush.msra.mxu0 %v170
    %196 = vmatpush.msra.mxu0 %v169
    %197 = vmatpush.msra.mxu0 %v168
    %198 = vmatpush.msra.mxu0 %v167
    %199 = vmatpush.msra.mxu0 %v166
    %200 = vmatpush.msra.mxu0 %v165
    %201 = vmatpush.msra.mxu0 %v164
    %202 = vmatpush.msra.mxu0 %v163
    %203 = vmatpush.msra.mxu0 %v162
    %204 = vmatpush.msra.mxu0 %v161
    %205 = vmatpush.msra.mxu0 %v160
    %206 = vmatpush.msra.mxu0 %v159
    %207 = vmatmul.f32.gmra.mxu0 %v157
    %v208 = vpop.f32.mrf.mxu0
    %v209 = vadd.f32 0.0, %v208
    %210 = vdwg.mxu0
    %211 = vmatpush.msra.mxu0 %v190
    %212 = vmatpush.msra.mxu0 %v189
    %213 = vmatpush.msra.mxu0 %v188
    %214 = vmatpush.msra.mxu0 %v187
    %215 = vmatpush.msra.mxu0 %v186
    %216 = vmatpush.msra.mxu0 %v185
    %217 = vmatpush.msra.mxu0 %v184
    %218 = vmatpush.msra.mxu0 %v183
    %219 = vmatpush.msra.mxu0 %v182
    %220 = vmatpush.msra.mxu0 %v181
    %221 = vmatpush.msra.mxu0 %v180
    %222 = vmatpush.msra.mxu0 %v179
    %223 = vmatpush.msra.mxu0 %v178
    %224 = vmatpush.msra.mxu0 %v177
    %225 = vmatpush.msra.mxu0 %v176
    %226 = vmatpush.msra.mxu0 %v175
    %227 = vmatmul.f32.gmra.mxu0 %v158
    %v228 = vpop.f32.mrf.mxu0
    %v229 = vadd.f32 %v209, %v228
    %230 = vdwg.mxu0
    %231 = vmatpush.msra.mxu0 %v140
    %232 = vmatpush.msra.mxu0 %v139
    %233 = vmatpush.msra.mxu0 %v138
    %234 = vmatpush.msra.mxu0 %v137
    %235 = vmatpush.msra.mxu0 %v136
    %236 = vmatpush.msra.mxu0 %v135
    %237 = vmatpush.msra.mxu0 %v134
    %238 = vmatpush.msra.mxu0 %v133
    %239 = vmatpush.msra.mxu0 %v132
    %240 = vmatpush.msra.mxu0 %v131
    %241 = vmatpush.msra.mxu0 %v130
    %242 = vmatpush.msra.mxu0 %v129
    %243 = vmatpush.msra.mxu0 %v128
    %244 = vmatpush.msra.mxu0 %v127
    %245 = vmatpush.msra.mxu0 %v126
    %246 = vmatpush.msra.mxu0 %v125
    %247 = vmatmul.f32.gmra.mxu0 %v123
    %v248 = vpop.f32.mrf.mxu0
    %v249 = vadd.f32 %v229, %v248
    %250 = vdwg.mxu0
    %251 = vmatpush.msra.mxu0 %v156
    %252 = vmatpush.msra.mxu0 %v155
    %253 = vmatpush.msra.mxu0 %v154
    %254 = vmatpush.msra.mxu0 %v153
    %255 = vmatpush.msra.mxu0 %v152
    %256 = vmatpush.msra.mxu0 %v151
    %257 = vmatpush.msra.mxu0 %v150
    %258 = vmatpush.msra.mxu0 %v149
    %259 = vmatpush.msra.mxu0 %v148
    %260 = vmatpush.msra.mxu0 %v147
    %261 = vmatpush.msra.mxu0 %v146
    %262 = vmatpush.msra.mxu0 %v145
    %263 = vmatpush.msra.mxu0 %v144
    %264 = vmatpush.msra.mxu0 %v143
    %265 = vmatpush.msra.mxu0 %v142
    %266 = vmatpush.msra.mxu0 %v141
    %267 = vmatmul.f32.gmra.mxu0 %v124
    %v268 = vpop.f32.mrf.mxu0
    %v269 = vadd.f32 %v249, %v268
    %270 = vdwg.mxu0
    %v271 = vld [vmem:[%s4] sm:$0x1]
    %v273 = vperm.slane %v271, 0
    %v275 = vadd.f32 %v269, %v273
    %v276 = vmax.f32 %v275, 0.0
    %v277 = vld [vmem:[#allocation10] sm:$0xff]
    %v278 = vld [vmem:[#allocation10 + $0x8] sm:$0xff]
    %v279 = vld [vmem:[#allocation10 + $0x10] sm:$0xff]
    %v280 = vld [vmem:[#allocation10 + $0x18] sm:$0xff]
    %v281 = vld [vmem:[#allocation10 + $0x20] sm:$0xff]
    %v282 = vld [vmem:[#allocation10 + $0x28] sm:$0xff]
    %v283 = vld [vmem:[#allocation10 + $0x30] sm:$0xff]
    %v284 = vld [vmem:[#allocation10 + $0x38] sm:$0xff]
    %v285 = vld [vmem:[#allocation10 + $0x40] sm:$0xff]
    %v286 = vld [vmem:[#allocation10 + $0x48] sm:$0xff]
    %v287 = vld [vmem:[#allocation10 + $0x50] sm:$0xff]
    %v288 = vld [vmem:[#allocation10 + $0x58] sm:$0xff]
    %v289 = vld [vmem:[#allocation10 + $0x60] sm:$0xff]
    %v290 = vld [vmem:[#allocation10 + $0x68] sm:$0xff]
    %v291 = vld [vmem:[#allocation10 + $0x70] sm:$0xff]
    %v292 = vld [vmem:[#allocation10 + $0x78] sm:$0xff]
    %v293 = vld [vmem:[%s6] sm:$0x1]
    %v295 = vperm.slane %v293, 0
    %297 = vmatpush.msra.mxu0 %v292
    %298 = vmatpush.msra.mxu0 %v291
    %299 = vmatpush.msra.mxu0 %v290
    %300 = vmatpush.msra.mxu0 %v289
    %301 = vmatpush.msra.mxu0 %v288
    %302 = vmatpush.msra.mxu0 %v287
    %303 = vmatpush.msra.mxu0 %v286
    %304 = vmatpush.msra.mxu0 %v285
    %305 = vmatpush.msra.mxu0 %v284
    %306 = vmatpush.msra.mxu0 %v283
    %307 = vmatpush.msra.mxu0 %v282
    %308 = vmatpush.msra.mxu0 %v281
    %309 = vmatpush.msra.mxu0 %v280
    %310 = vmatpush.msra.mxu0 %v279
    %311 = vmatpush.msra.mxu0 %v278
    %312 = vmatpush.msra.mxu0 %v277
    %313 = vmatmul.f32.gmra.mxu0 %v276
    %v314 = vpop.f32.mrf.mxu0
    %v315 = vadd.f32 %v295, %v314
    %316 = vdwg.mxu0
    %v317 = vmax.f32 %v315, 0.0
    %v318 = vld [vmem:[#allocation11] sm:$0xff]
    %v319 = vld [vmem:[#allocation11 + $0x8] sm:$0xff]
    %v320 = vld [vmem:[#allocation11 + $0x10] sm:$0xff]
    %v321 = vld [vmem:[#allocation11 + $0x18] sm:$0xff]
    %v322 = vld [vmem:[#allocation11 + $0x20] sm:$0xff]
    %v323 = vld [vmem:[#allocation11 + $0x28] sm:$0xff]
    %v324 = vld [vmem:[#allocation11 + $0x30] sm:$0xff]
    %v325 = vld [vmem:[#allocation11 + $0x38] sm:$0xff]
    %v326 = vld [vmem:[#allocation11 + $0x40] sm:$0xff]
    %v327 = vld [vmem:[#allocation11 + $0x48] sm:$0xff]
    %v328 = vld [vmem:[#allocation11 + $0x50] sm:$0xff]
    %v329 = vld [vmem:[#allocation11 + $0x58] sm:$0xff]
    %v330 = vld [vmem:[#allocation11 + $0x60] sm:$0xff]
    %v331 = vld [vmem:[#allocation11 + $0x68] sm:$0xff]
    %v332 = vld [vmem:[#allocation11 + $0x70] sm:$0xff]
    %v333 = vld [vmem:[#allocation11 + $0x78] sm:$0xff]
    %v334 = vld [vmem:[%s8] sm:$0x1]
    %v336 = vperm.slane %v334, 0
    %338 = vmatpush.msra.mxu0 %v333
    %339 = vmatpush.msra.mxu0 %v332
    %340 = vmatpush.msra.mxu0 %v331
    %341 = vmatpush.msra.mxu0 %v330
    %342 = vmatpush.msra.mxu0 %v329
    %343 = vmatpush.msra.mxu0 %v328
    %344 = vmatpush.msra.mxu0 %v327
    %345 = vmatpush.msra.mxu0 %v326
    %346 = vmatpush.msra.mxu0 %v325
    %347 = vmatpush.msra.mxu0 %v324
    %348 = vmatpush.msra.mxu0 %v323
    %349 = vmatpush.msra.mxu0 %v322
    %350 = vmatpush.msra.mxu0 %v321
    %351 = vmatpush.msra.mxu0 %v320
    %352 = vmatpush.msra.mxu0 %v319
    %353 = vmatpush.msra.mxu0 %v318
    %354 = vmatmul.f32.gmra.mxu0 %v317
    %v355 = vpop.f32.mrf.mxu0
    %v356 = vadd.f32 %v336, %v355
    %357 = vdwg.mxu0
    %358 = vst [vmem:[#allocation13] sm:$0xff] %v356
    // Predicated region
    $region62: #{tpu_custom_call.1} parent=1 // pred_check
      _
    $region63: #{tpu_custom_call.1} parent=1 // pred_check_branch
      %360 = sbr.rel (0) target = $region65
    $region64: #{tpu_custom_call.1} parent=1 // pred_region
      %362 = vsyncadd [#allocation4], 0
      %s364 = sshll.u32 [#allocation13], 4
      %s365 = int_to_ptr.vmem [resolvable:$true] %s364
      %s366 = sshll.u32 %s9, 4
      %s367 = int_to_ptr.hbm [resolvable:$true] %s366
      %369 = dma.vmem_to_hbm [thread:$0]  %s365, 128, %s367, [#allocation4]
    $region65: #{tpu_custom_call.1} parent=1 // pred_fallthru
      _
    // Predicated region
    $region66: #{tpu_custom_call.1} parent=1 // pred_check
      _
    $region67: #{tpu_custom_call.1} parent=1 // pred_check_branch
      %371 = sbr.rel (0) target = $region69
    $region68: #{tpu_custom_call.1} parent=1 // pred_region
      %373 = dma.done [#allocation4], 128
    $region69: #{tpu_custom_call.1} parent=1 // pred_fallthru
      _
    %374 = vsyncpa [#allocation3], 1
    %375 = vsyncpa [#allocation6], 1
    %376 = vsyncpa [#allocation9], 1
    %377 = vsyncpa [#allocation12], 1
    %378 = vsyncpa [#allocation4], 1

</llo_original>
